<compile_context>
chip_gen: v5e
topology: v5e:2x2
jax: 0.10.0
libtpu: 0.0.40
codegen_flags: <defaults>
</compile_context>

<pallas_src>
import math

import jax
import jax.numpy as jnp
from jax import lax
from jax.experimental import pallas as pl
from jax.experimental.pallas import tpu as pltpu

_INV_SQRT2 = 1.0 / math.sqrt(2.0)


def _gelu_exact(x):
    # Exact GELU (matches torch.nn.GELU() default): 0.5*x*(1+erf(x/sqrt(2)))
    return 0.5 * x * (1.0 + lax.erf(x * _INV_SQRT2))


def _dot_bf16_3x(a_f32, b_hi, b_lo):
    """3-pass bf16 matmul with f32 accumulation (drops only the lo*lo term).

    b_hi/b_lo are host-precomputed bf16 splits of the f32 weight. Only the
    activation is split in-kernel (2 casts + 1 subtract on the VPU). Relative
    error ~1e-5, comfortably inside the 1e-4 check tolerance, while using
    MXU-native bf16 passes instead of a full-f32 matmul.
    """
    a_hi = a_f32.astype(jnp.bfloat16)
    a_lo = (a_f32 - a_hi.astype(jnp.float32)).astype(jnp.bfloat16)
    acc = jnp.dot(a_hi, b_hi, preferred_element_type=jnp.float32)
    acc = acc + jnp.dot(a_lo, b_hi, preferred_element_type=jnp.float32)
    acc = acc + jnp.dot(a_hi, b_lo, preferred_element_type=jnp.float32)
    return acc


def _ae_kernel(x_ref,
               w1h_ref, w1l_ref, b1_ref,          # encoder L1 (bf16_3x)
               w2_ref, b2_ref,                    # encoder L2
               w34_ref, b34_ref,                  # fused encoder L3 + decoder L4
               w5_ref, b5_ref,                    # decoder L5
               w6h_ref, w6l_ref, b6_ref,          # decoder L6 (bf16_3x, lane-padded out)
               out_ref):
    x = x_ref[...]

    h = _gelu_exact(_dot_bf16_3x(x, w1h_ref[...], w1l_ref[...]) + b1_ref[...])
    h = _gelu_exact(
        jnp.dot(h, w2_ref[...], preferred_element_type=jnp.float32) + b2_ref[...])
    # fused: GELU((h @ W3 + b3) @ W4 + b4) == GELU(h @ (W3@W4) + (b3@W4 + b4))
    h = _gelu_exact(
        jnp.dot(h, w34_ref[...], preferred_element_type=jnp.float32) + b34_ref[...])
    h = _gelu_exact(
        jnp.dot(h, w5_ref[...], preferred_element_type=jnp.float32) + b5_ref[...])
    y = _dot_bf16_3x(h, w6h_ref[...], w6l_ref[...]) + b6_ref[...]

    out_ref[...] = y.astype(out_ref.dtype)


def _round_up(v, m):
    return ((v + m - 1) // m) * m


def _split_bf16(w):
    hi = w.astype(jnp.bfloat16)
    lo = (w - hi.astype(jnp.float32)).astype(jnp.bfloat16)
    return hi, lo


def autoencoder_forward(x, params, *, batch_tile=1024, core_parallel=None,
                        vmem_budget_bytes=12 * 1024 * 1024):
    """x: [B, input_dim] float32. params: dict of PyTorch-convention weights/biases.

    PyTorch Linear computes y = x @ W.T + b with W of shape [out, in]; weights are
    pre-transposed here so the kernel does x @ W_t with W_t of shape [in, out].
    """
    x = jnp.asarray(x, jnp.float32)
    B, D = x.shape

    # --- host-side parameter prep -------------------------------------------
    wt = [jnp.asarray(params[f"w{i}"], jnp.float32).T for i in range(1, 7)]   # [in, out]
    bs = [jnp.asarray(params[f"b{i}"], jnp.float32) for i in range(1, 7)]     # [out]
    assert wt[0].shape[0] == D and wt[5].shape[1] == D

    # Fuse Linear(32, L) and Linear(L, 32): no nonlinearity between them.
    w34 = wt[2] @ wt[3]                       # [32, 32]
    b34 = bs[2] @ wt[3] + bs[3]               # [32]

    # Lane-dense output: pad final-layer output features to a multiple of 128
    # (zero weight columns + zero bias) so the out tile uses unmasked vst's.
    D_out = _round_up(D, 128)
    w6, b6 = wt[5], bs[5]
    if D_out != D:
        w6 = jnp.pad(w6, ((0, 0), (0, D_out - D)))
        b6 = jnp.pad(b6, ((0, D_out - D),))

    # bf16 hi/lo splits for the two D-sized matmuls (bf16_3x path).
    w1_hi, w1_lo = _split_bf16(wt[0])
    w6_hi, w6_lo = _split_bf16(w6)

    flat_params = [
        w1_hi, w1_lo, bs[0].reshape(1, -1),
        wt[1], bs[1].reshape(1, -1),
        w34, b34.reshape(1, -1),
        wt[4], bs[4].reshape(1, -1),
        w6_hi, w6_lo, b6.reshape(1, -1),
    ]
    param_bytes = sum(int(p.size) * p.dtype.itemsize for p in flat_params)

    # --- batch tiling (D-aware VMEM cap, TB forced to a multiple of 8) -------
    def tile_footprint(tb):
        io = 2 * tb * D * 4 + 2 * tb * D_out * 4              # double-buffered x/out
        acts = tb * (D + 2 * 128 + 2 * 32 + D_out) * 4        # f32 intermediates (upper bound)
        acts += tb * (D + 128) * 2 * 2                         # bf16 hi/lo activation splits
        return io + acts + 2 * param_bytes                     # weights (conservatively x2)

    cap = max(8, (int(batch_tile) // 8) * 8)
    TB = min(cap, _round_up(B, 8))
    while TB > 8 and tile_footprint(TB) > vmem_budget_bytes:
        TB = max(8, ((TB // 2) // 8) * 8)

    grid = (pl.cdiv(B, TB),)   # ragged last tile handled by Pallas masking; no x copy

    # --- dimension semantics (explicit dual-TC sharding on v7x) --------------
    if core_parallel is None:
        try:
            kind = jax.devices()[0].device_kind.lower()
        except Exception:  # pragma: no cover
            kind = ""
        core_parallel = ("v7" in kind) or ("tpu7" in kind)
    if core_parallel and grid[0] > 1 and hasattr(pltpu, "CORE_PARALLEL"):
        dim_sem = (pltpu.CORE_PARALLEL,)
    else:
        dim_sem = ("parallel",)

    compiler_kwargs = {}
    footprint = tile_footprint(TB)
    if footprint > 14 * 1024 * 1024:
        # Only needed when D (and hence the tile footprint / resident weights)
        # is large; keeps v5e's smaller default scoped limit from biting first.
        compiler_kwargs["vmem_limit_bytes"] = int(min(footprint + (4 << 20), 48 << 20))

    # --- advisory cost estimate ----------------------------------------------
    layer_dims = [(D, 128), (128, 32), (32, 32), (32, 128), (128, D_out)]
    flops = 2 * B * sum(i * o for i, o in layer_dims)
    transcendentals = B * (128 + 32 + 32 + 128)            # one erf per GELU element
    bytes_accessed = 4 * B * (D + D_out) + param_bytes
    cost = pl.CostEstimate(flops=flops, transcendentals=transcendentals,
                           bytes_accessed=bytes_accessed)

    # --- specs ----------------------------------------------------------------
    # x block last dim == full array dim (allowed even when D % 128 != 0).
    # NOTE: if profiling ever shows exposed input DMA at very large D, add
    # pipeline_mode=pl.Buffered(3) to x_spec (skip on v7x if VMEM-tight).
    x_spec = pl.BlockSpec((TB, D), lambda i: (i, 0))
    out_spec = pl.BlockSpec((TB, D_out), lambda i: (i, 0))
    # Weights/biases: full-array blocks, constant index -> stay VMEM-resident.
    param_specs = [pl.BlockSpec(p.shape, lambda i: (0, 0)) for p in flat_params]

    out = pl.pallas_call(
        _ae_kernel,
        out_shape=jax.ShapeDtypeStruct((B, D_out), jnp.float32),
        grid=grid,
        in_specs=[x_spec] + param_specs,
        out_specs=out_spec,
        compiler_params=pltpu.CompilerParams(
            dimension_semantics=dim_sem, **compiler_kwargs),
        cost_estimate=cost,
    )(x, *flat_params)

    return out[:, :D] if D_out != D else out


def init_params(key, input_dim, latent_dim=10):
    """Deterministic init mimicking torch.nn.Linear default (Kaiming-uniform-ish)."""
    dims = [
        (128, input_dim), (32, 128), (latent_dim, 32),          # encoder
        (32, latent_dim), (128, 32), (input_dim, 128),          # decoder
    ]
    params = {}
    keys = jax.random.split(key, 2 * len(dims))
    for i, (out_f, in_f) in enumerate(dims):
        bound = 1.0 / math.sqrt(in_f)
        params[f"w{i+1}"] = jax.random.uniform(
            keys[2 * i], (out_f, in_f), jnp.float32, -bound, bound)
        params[f"b{i+1}"] = jax.random.uniform(
            keys[2 * i + 1], (out_f,), jnp.float32, -bound, bound)
    return params


def reference_forward(x, params):
    """Pure-JAX reference replicating the (unfused) PyTorch forward."""
    def linear(h, i):
        return jnp.dot(h, params[f"w{i}"].T,
                       precision=lax.Precision.HIGHEST) + params[f"b{i}"]
    gelu = lambda h: 0.5 * h * (1.0 + lax.erf(h * _INV_SQRT2))
    h = gelu(linear(x, 1))
    h = gelu(linear(h, 2))
    z = linear(h, 3)
    h = gelu(linear(z, 4))
    h = gelu(linear(h, 5))
    return linear(h, 6)


if __name__ == "__main__":
    key = jax.random.PRNGKey(0)
    k_param, k_x = jax.random.split(key)

    batch = 16
    input_dim = 64
    latent_dim = 10

    params = init_params(k_param, input_dim, latent_dim)
    x = jax.random.normal(k_x, (batch, input_dim), jnp.float32)

    out = autoencoder_forward(x, params)
    out = jax.block_until_ready(out)

    ref = reference_forward(x, params)
    assert out.shape == (batch, input_dim)
    assert jnp.allclose(out, ref, atol=1e-4, rtol=1e-4), "mismatch vs JAX reference"

    print("KERNEL_OK")
</pallas_src>

<mosaic_0001>
module attributes {stable_mosaic.version = 11 : i64} {
  func.func @_ae_kernel(%arg0: i32, %arg1: memref<16x64xf32, #tpu.memory_space<vmem>>, %arg2: memref<64x128xbf16, #tpu.memory_space<vmem>>, %arg3: memref<64x128xbf16, #tpu.memory_space<vmem>>, %arg4: memref<1x128xf32, #tpu.memory_space<vmem>>, %arg5: memref<128x32xf32, #tpu.memory_space<vmem>>, %arg6: memref<1x32xf32, #tpu.memory_space<vmem>>, %arg7: memref<32x32xf32, #tpu.memory_space<vmem>>, %arg8: memref<1x32xf32, #tpu.memory_space<vmem>>, %arg9: memref<32x128xf32, #tpu.memory_space<vmem>>, %arg10: memref<1x128xf32, #tpu.memory_space<vmem>>, %arg11: memref<128x128xbf16, #tpu.memory_space<vmem>>, %arg12: memref<128x128xbf16, #tpu.memory_space<vmem>>, %arg13: memref<1x128xf32, #tpu.memory_space<vmem>>, %arg14: memref<16x128xf32, #tpu.memory_space<vmem>>) attributes {dimension_semantics = [#tpu.dimension_semantics<parallel>], iteration_bounds = array<i64: 1>, scalar_prefetch = 0 : i64, scratch_operands = 0 : i64, tpu.core_type = #tpu.core_type<tc>, window_params = [{transform_indices = @transform_0, window_bounds = array<i64: 16, 64>}, {pipeline_mode = #tpu.pipeline_mode<synchronous>, transform_indices = @transform_1, window_bounds = array<i64: 64, 128>}, {pipeline_mode = #tpu.pipeline_mode<synchronous>, transform_indices = @transform_2, window_bounds = array<i64: 64, 128>}, {pipeline_mode = #tpu.pipeline_mode<synchronous>, transform_indices = @transform_3, window_bounds = array<i64: 1, 128>}, {pipeline_mode = #tpu.pipeline_mode<synchronous>, transform_indices = @transform_4, window_bounds = array<i64: 128, 32>}, {pipeline_mode = #tpu.pipeline_mode<synchronous>, transform_indices = @transform_5, window_bounds = array<i64: 1, 32>}, {pipeline_mode = #tpu.pipeline_mode<synchronous>, transform_indices = @transform_6, window_bounds = array<i64: 32, 32>}, {pipeline_mode = #tpu.pipeline_mode<synchronous>, transform_indices = @transform_7, window_bounds = array<i64: 1, 32>}, {pipeline_mode = #tpu.pipeline_mode<synchronous>, transform_indices = @transform_8, window_bounds = array<i64: 32, 128>}, {pipeline_mode = #tpu.pipeline_mode<synchronous>, transform_indices = @transform_9, window_bounds = array<i64: 1, 128>}, {pipeline_mode = #tpu.pipeline_mode<synchronous>, transform_indices = @transform_10, window_bounds = array<i64: 128, 128>}, {pipeline_mode = #tpu.pipeline_mode<synchronous>, transform_indices = @transform_11, window_bounds = array<i64: 128, 128>}, {pipeline_mode = #tpu.pipeline_mode<synchronous>, transform_indices = @transform_12, window_bounds = array<i64: 1, 128>}, {transform_indices = @transform_13, window_bounds = array<i64: 16, 128>}]} {
    %c0 = arith.constant 0 : index
    %c0_0 = arith.constant 0 : index
    %0 = vector.load %arg1[%c0, %c0_0] : memref<16x64xf32, #tpu.memory_space<vmem>>, vector<16x64xf32>
    %c0_1 = arith.constant 0 : index
    %c0_2 = arith.constant 0 : index
    %1 = vector.load %arg2[%c0_1, %c0_2] : memref<64x128xbf16, #tpu.memory_space<vmem>>, vector<64x128xbf16>
    %c0_3 = arith.constant 0 : index
    %c0_4 = arith.constant 0 : index
    %2 = vector.load %arg3[%c0_3, %c0_4] : memref<64x128xbf16, #tpu.memory_space<vmem>>, vector<64x128xbf16>
    %3 = arith.truncf %0 : vector<16x64xf32> to vector<16x64xbf16>
    %4 = arith.extf %3 : vector<16x64xbf16> to vector<16x64xf32>
    %5 = arith.subf %0, %4 : vector<16x64xf32>
    %6 = arith.truncf %5 : vector<16x64xf32> to vector<16x64xbf16>
    %cst = arith.constant dense<0.000000e+00> : vector<16x128xf32>
    %7 = tpu.matmul %3, %1, %cst {dimension_numbers = #tpu.dot_dimension_numbers<[1], [0], [0], [1], [0, 0, 1, 1], [], []>} : vector<16x64xbf16>, vector<64x128xbf16>, vector<16x128xf32> -> vector<16x128xf32>
    %cst_5 = arith.constant dense<0.000000e+00> : vector<16x128xf32>
    %8 = tpu.matmul %6, %1, %cst_5 {dimension_numbers = #tpu.dot_dimension_numbers<[1], [0], [0], [1], [0, 0, 1, 1], [], []>} : vector<16x64xbf16>, vector<64x128xbf16>, vector<16x128xf32> -> vector<16x128xf32>
    %9 = arith.addf %7, %8 : vector<16x128xf32>
    %cst_6 = arith.constant dense<0.000000e+00> : vector<16x128xf32>
    %10 = tpu.matmul %3, %2, %cst_6 {dimension_numbers = #tpu.dot_dimension_numbers<[1], [0], [0], [1], [0, 0, 1, 1], [], []>} : vector<16x64xbf16>, vector<64x128xbf16>, vector<16x128xf32> -> vector<16x128xf32>
    %11 = arith.addf %9, %10 : vector<16x128xf32>
    %c0_7 = arith.constant 0 : index
    %c0_8 = arith.constant 0 : index
    %12 = vector.load %arg4[%c0_7, %c0_8] : memref<1x128xf32, #tpu.memory_space<vmem>>, vector<1x128xf32>
    %13 = vector.broadcast %12 : vector<1x128xf32> to vector<16x128xf32>
    %14 = arith.addf %11, %13 : vector<16x128xf32>
    %cst_9 = arith.constant 5.000000e-01 : f32
    %15 = vector.broadcast %cst_9 : f32 to vector<16x128xf32>
    %16 = arith.mulf %15, %14 : vector<16x128xf32>
    %cst_10 = arith.constant 0.707106769 : f32
    %17 = vector.broadcast %cst_10 : f32 to vector<16x128xf32>
    %18 = arith.mulf %14, %17 : vector<16x128xf32>
    %19 = math.erf %18 : vector<16x128xf32>
    %cst_11 = arith.constant 1.000000e+00 : f32
    %20 = vector.broadcast %cst_11 : f32 to vector<16x128xf32>
    %21 = arith.addf %20, %19 : vector<16x128xf32>
    %22 = arith.mulf %16, %21 : vector<16x128xf32>
    %c0_12 = arith.constant 0 : index
    %c0_13 = arith.constant 0 : index
    %23 = vector.load %arg5[%c0_12, %c0_13] : memref<128x32xf32, #tpu.memory_space<vmem>>, vector<128x32xf32>
    %cst_14 = arith.constant dense<0.000000e+00> : vector<16x32xf32>
    %24 = tpu.matmul %22, %23, %cst_14 {dimension_numbers = #tpu.dot_dimension_numbers<[1], [0], [0], [1], [0, 0, 1, 1], [], []>} : vector<16x128xf32>, vector<128x32xf32>, vector<16x32xf32> -> vector<16x32xf32>
    %c0_15 = arith.constant 0 : index
    %c0_16 = arith.constant 0 : index
    %25 = vector.load %arg6[%c0_15, %c0_16] : memref<1x32xf32, #tpu.memory_space<vmem>>, vector<1x32xf32>
    %26 = vector.broadcast %25 : vector<1x32xf32> to vector<16x32xf32>
    %27 = arith.addf %24, %26 : vector<16x32xf32>
    %cst_17 = arith.constant 5.000000e-01 : f32
    %28 = vector.broadcast %cst_17 : f32 to vector<16x32xf32>
    %29 = arith.mulf %28, %27 : vector<16x32xf32>
    %cst_18 = arith.constant 0.707106769 : f32
    %30 = vector.broadcast %cst_18 : f32 to vector<16x32xf32>
    %31 = arith.mulf %27, %30 : vector<16x32xf32>
    %32 = math.erf %31 : vector<16x32xf32>
    %cst_19 = arith.constant 1.000000e+00 : f32
    %33 = vector.broadcast %cst_19 : f32 to vector<16x32xf32>
    %34 = arith.addf %33, %32 : vector<16x32xf32>
    %35 = arith.mulf %29, %34 : vector<16x32xf32>
    %c0_20 = arith.constant 0 : index
    %c0_21 = arith.constant 0 : index
    %36 = vector.load %arg7[%c0_20, %c0_21] : memref<32x32xf32, #tpu.memory_space<vmem>>, vector<32x32xf32>
    %cst_22 = arith.constant dense<0.000000e+00> : vector<16x32xf32>
    %37 = tpu.matmul %35, %36, %cst_22 {dimension_numbers = #tpu.dot_dimension_numbers<[1], [0], [0], [1], [0, 0, 1, 1], [], []>} : vector<16x32xf32>, vector<32x32xf32>, vector<16x32xf32> -> vector<16x32xf32>
    %c0_23 = arith.constant 0 : index
    %c0_24 = arith.constant 0 : index
    %38 = vector.load %arg8[%c0_23, %c0_24] : memref<1x32xf32, #tpu.memory_space<vmem>>, vector<1x32xf32>
    %39 = vector.broadcast %38 : vector<1x32xf32> to vector<16x32xf32>
    %40 = arith.addf %37, %39 : vector<16x32xf32>
    %cst_25 = arith.constant 5.000000e-01 : f32
    %41 = vector.broadcast %cst_25 : f32 to vector<16x32xf32>
    %42 = arith.mulf %41, %40 : vector<16x32xf32>
    %cst_26 = arith.constant 0.707106769 : f32
    %43 = vector.broadcast %cst_26 : f32 to vector<16x32xf32>
    %44 = arith.mulf %40, %43 : vector<16x32xf32>
    %45 = math.erf %44 : vector<16x32xf32>
    %cst_27 = arith.constant 1.000000e+00 : f32
    %46 = vector.broadcast %cst_27 : f32 to vector<16x32xf32>
    %47 = arith.addf %46, %45 : vector<16x32xf32>
    %48 = arith.mulf %42, %47 : vector<16x32xf32>
    %c0_28 = arith.constant 0 : index
    %c0_29 = arith.constant 0 : index
    %49 = vector.load %arg9[%c0_28, %c0_29] : memref<32x128xf32, #tpu.memory_space<vmem>>, vector<32x128xf32>
    %cst_30 = arith.constant dense<0.000000e+00> : vector<16x128xf32>
    %50 = tpu.matmul %48, %49, %cst_30 {dimension_numbers = #tpu.dot_dimension_numbers<[1], [0], [0], [1], [0, 0, 1, 1], [], []>} : vector<16x32xf32>, vector<32x128xf32>, vector<16x128xf32> -> vector<16x128xf32>
    %c0_31 = arith.constant 0 : index
    %c0_32 = arith.constant 0 : index
    %51 = vector.load %arg10[%c0_31, %c0_32] : memref<1x128xf32, #tpu.memory_space<vmem>>, vector<1x128xf32>
    %52 = vector.broadcast %51 : vector<1x128xf32> to vector<16x128xf32>
    %53 = arith.addf %50, %52 : vector<16x128xf32>
    %cst_33 = arith.constant 5.000000e-01 : f32
    %54 = vector.broadcast %cst_33 : f32 to vector<16x128xf32>
    %55 = arith.mulf %54, %53 : vector<16x128xf32>
    %cst_34 = arith.constant 0.707106769 : f32
    %56 = vector.broadcast %cst_34 : f32 to vector<16x128xf32>
    %57 = arith.mulf %53, %56 : vector<16x128xf32>
    %58 = math.erf %57 : vector<16x128xf32>
    %cst_35 = arith.constant 1.000000e+00 : f32
    %59 = vector.broadcast %cst_35 : f32 to vector<16x128xf32>
    %60 = arith.addf %59, %58 : vector<16x128xf32>
    %61 = arith.mulf %55, %60 : vector<16x128xf32>
    %c0_36 = arith.constant 0 : index
    %c0_37 = arith.constant 0 : index
    %62 = vector.load %arg11[%c0_36, %c0_37] : memref<128x128xbf16, #tpu.memory_space<vmem>>, vector<128x128xbf16>
    %c0_38 = arith.constant 0 : index
    %c0_39 = arith.constant 0 : index
    %63 = vector.load %arg12[%c0_38, %c0_39] : memref<128x128xbf16, #tpu.memory_space<vmem>>, vector<128x128xbf16>
    %64 = arith.truncf %61 : vector<16x128xf32> to vector<16x128xbf16>
    %65 = arith.extf %64 : vector<16x128xbf16> to vector<16x128xf32>
    %66 = arith.subf %61, %65 : vector<16x128xf32>
    %67 = arith.truncf %66 : vector<16x128xf32> to vector<16x128xbf16>
    %cst_40 = arith.constant dense<0.000000e+00> : vector<16x128xf32>
    %68 = tpu.matmul %64, %62, %cst_40 {dimension_numbers = #tpu.dot_dimension_numbers<[1], [0], [0], [1], [0, 0, 1, 1], [], []>} : vector<16x128xbf16>, vector<128x128xbf16>, vector<16x128xf32> -> vector<16x128xf32>
    %cst_41 = arith.constant dense<0.000000e+00> : vector<16x128xf32>
    %69 = tpu.matmul %67, %62, %cst_41 {dimension_numbers = #tpu.dot_dimension_numbers<[1], [0], [0], [1], [0, 0, 1, 1], [], []>} : vector<16x128xbf16>, vector<128x128xbf16>, vector<16x128xf32> -> vector<16x128xf32>
    %70 = arith.addf %68, %69 : vector<16x128xf32>
    %cst_42 = arith.constant dense<0.000000e+00> : vector<16x128xf32>
    %71 = tpu.matmul %64, %63, %cst_42 {dimension_numbers = #tpu.dot_dimension_numbers<[1], [0], [0], [1], [0, 0, 1, 1], [], []>} : vector<16x128xbf16>, vector<128x128xbf16>, vector<16x128xf32> -> vector<16x128xf32>
    %72 = arith.addf %70, %71 : vector<16x128xf32>
    %c0_43 = arith.constant 0 : index
    %c0_44 = arith.constant 0 : index
    %73 = vector.load %arg13[%c0_43, %c0_44] : memref<1x128xf32, #tpu.memory_space<vmem>>, vector<1x128xf32>
    %74 = vector.broadcast %73 : vector<1x128xf32> to vector<16x128xf32>
    %75 = arith.addf %72, %74 : vector<16x128xf32>
    %c0_45 = arith.constant 0 : index
    %c0_46 = arith.constant 0 : index
    %76 = vector.load %arg14[%c0_45, %c0_46] : memref<16x128xf32, #tpu.memory_space<vmem>>, vector<16x128xf32>
    tpu.vector_store %arg14[%c0_45, %c0_46], %75 {strides = array<i32>} : memref<16x128xf32, #tpu.memory_space<vmem>>, vector<16x128xf32>,
    return
  }
  func.func @transform_0(%arg0: i32) -> (i32, i32) {
    %c0_i32 = arith.constant 0 : i32
    %c0_i32_0 = arith.constant 0 : i32
    return %arg0, %c0_i32 : i32, i32
  }
  func.func @transform_1(%arg0: i32) -> (i32, i32) {
    %c0_i32 = arith.constant 0 : i32
    %c0_i32_0 = arith.constant 0 : i32
    %c0_i32_1 = arith.constant 0 : i32
    return %c0_i32, %c0_i32_0 : i32, i32
  }
  func.func @transform_2(%arg0: i32) -> (i32, i32) {
    %c0_i32 = arith.constant 0 : i32
    %c0_i32_0 = arith.constant 0 : i32
    %c0_i32_1 = arith.constant 0 : i32
    return %c0_i32, %c0_i32_0 : i32, i32
  }
  func.func @transform_3(%arg0: i32) -> (i32, i32) {
    %c0_i32 = arith.constant 0 : i32
    %c0_i32_0 = arith.constant 0 : i32
    %c0_i32_1 = arith.constant 0 : i32
    return %c0_i32, %c0_i32_0 : i32, i32
  }
  func.func @transform_4(%arg0: i32) -> (i32, i32) {
    %c0_i32 = arith.constant 0 : i32
    %c0_i32_0 = arith.constant 0 : i32
    %c0_i32_1 = arith.constant 0 : i32
    return %c0_i32, %c0_i32_0 : i32, i32
  }
  func.func @transform_5(%arg0: i32) -> (i32, i32) {
    %c0_i32 = arith.constant 0 : i32
    %c0_i32_0 = arith.constant 0 : i32
    %c0_i32_1 = arith.constant 0 : i32
    return %c0_i32, %c0_i32_0 : i32, i32
  }
  func.func @transform_6(%arg0: i32) -> (i32, i32) {
    %c0_i32 = arith.constant 0 : i32
    %c0_i32_0 = arith.constant 0 : i32
    %c0_i32_1 = arith.constant 0 : i32
    return %c0_i32, %c0_i32_0 : i32, i32
  }
  func.func @transform_7(%arg0: i32) -> (i32, i32) {
    %c0_i32 = arith.constant 0 : i32
    %c0_i32_0 = arith.constant 0 : i32
    %c0_i32_1 = arith.constant 0 : i32
    return %c0_i32, %c0_i32_0 : i32, i32
  }
  func.func @transform_8(%arg0: i32) -> (i32, i32) {
    %c0_i32 = arith.constant 0 : i32
    %c0_i32_0 = arith.constant 0 : i32
    %c0_i32_1 = arith.constant 0 : i32
    return %c0_i32, %c0_i32_0 : i32, i32
  }
  func.func @transform_9(%arg0: i32) -> (i32, i32) {
    %c0_i32 = arith.constant 0 : i32
    %c0_i32_0 = arith.constant 0 : i32
    %c0_i32_1 = arith.constant 0 : i32
    return %c0_i32, %c0_i32_0 : i32, i32
  }
  func.func @transform_10(%arg0: i32) -> (i32, i32) {
    %c0_i32 = arith.constant 0 : i32
    %c0_i32_0 = arith.constant 0 : i32
    %c0_i32_1 = arith.constant 0 : i32
    return %c0_i32, %c0_i32_0 : i32, i32
  }
  func.func @transform_11(%arg0: i32) -> (i32, i32) {
    %c0_i32 = arith.constant 0 : i32
    %c0_i32_0 = arith.constant 0 : i32
    %c0_i32_1 = arith.constant 0 : i32
    return %c0_i32, %c0_i32_0 : i32, i32
  }
  func.func @transform_12(%arg0: i32) -> (i32, i32) {
    %c0_i32 = arith.constant 0 : i32
    %c0_i32_0 = arith.constant 0 : i32
    %c0_i32_1 = arith.constant 0 : i32
    return %c0_i32, %c0_i32_0 : i32, i32
  }
  func.func @transform_13(%arg0: i32) -> (i32, i32) {
    %c0_i32 = arith.constant 0 : i32
    %c0_i32_0 = arith.constant 0 : i32
    return %arg0, %c0_i32 : i32, i32
  }
}

</mosaic_0001>

<llo_original>
// kernel: tpu_custom_call.1
$region0: #{tpu_custom_call.1}
  #allocation0 [shape = 'u32[]', space=smem, size = 0x4, offset = 0x4, fixed_abs, tag = 'smem constant byte address 0x4 - core index']
  #allocation1 [shape = 'u32[72,128]{1,0:T(1,128)}', space=vmem, size = 0x9000, scoped, tag = 'internal scratch']
  %s0 = inlined_call_operand.hbm [shape: f32[16,64], index: 0, kind: input, shape index: {}]
  %s1 = inlined_call_operand.vmem [shape: bf16[64,128], index: 1, kind: input, shape index: {}]
  %s2 = inlined_call_operand.hbm [shape: bf16[64,128], index: 2, kind: input, shape index: {}]
  %s3 = inlined_call_operand.vmem [shape: f32[1,128], index: 3, kind: input, shape index: {}]
  %s4 = inlined_call_operand.vmem [shape: f32[128,32], index: 4, kind: input, shape index: {}]
  %s5 = inlined_call_operand.vmem [shape: f32[1,32], index: 5, kind: input, shape index: {}]
  %s6 = inlined_call_operand.hbm [shape: f32[32,32], index: 6, kind: input, shape index: {}]
  %s7 = inlined_call_operand.vmem [shape: f32[1,32], index: 7, kind: input, shape index: {}]
  %s8 = inlined_call_operand.hbm [shape: f32[32,128], index: 8, kind: input, shape index: {}]
  %s9 = inlined_call_operand.vmem [shape: f32[1,128], index: 9, kind: input, shape index: {}]
  %s10 = inlined_call_operand.vmem [shape: bf16[128,128], index: 10, kind: input, shape index: {}]
  %s11 = inlined_call_operand.vmem [shape: bf16[128,128], index: 11, kind: input, shape index: {}]
  %s12 = inlined_call_operand.vmem [shape: f32[1,128], index: 12, kind: input, shape index: {}]
  %s13 = inlined_call_operand.hbm [shape: f32[16,128], index: 13, kind: output, shape index: {}]
  %s14 = sld [smem:[#allocation0]]
  $region78: #{tpu_custom_call.1} parent=0
    _
  %s16 = ssub.s32 1, %s14
  %s17 = scalar_select 0, %s16, %s14
  $region1: #{tpu_custom_call.1} parent=0
    #allocation2 [shape = 'u8[8192]{0}', space=vmem, size = 0x2000, scoped, tag = 'input window, operand 0, single buffered']
    #allocation3 [shape = 's32[1]{0}', space=sflag, size = 0x4, scoped, tag = 'scoped memory for tpu_custom_call.1']
    #allocation4 [shape = 's32[1]{0}', space=sflag, size = 0x4, scoped, tag = 'scoped memory for tpu_custom_call.1']
    #allocation5 [shape = 'u8[16384]{0}', space=vmem, size = 0x4000, scoped, tag = 'input window, operand 2, single buffered']
    #allocation6 [shape = 's32[1]{0}', space=sflag, size = 0x4, scoped, tag = 'scoped memory for tpu_custom_call.1']
    #allocation7 [shape = 'u8[16384]{0}', space=vmem, size = 0x4000, scoped, tag = 'input window, operand 6, single buffered']
    #allocation8 [shape = 'u8[16384]{0}', space=vmem, size = 0x4000, scoped, tag = 'input window, operand 8, single buffered']
    #allocation9 [shape = 's32[1]{0}', space=sflag, size = 0x4, scoped, tag = 'scoped memory for tpu_custom_call.1']
    #allocation10 [shape = 'u8[8192]{0}', space=vmem, size = 0x2000, scoped, tag = 'output window, operand 0, single buffered']
    %18 = vsyncpa [#allocation3], 0
    %19 = vsyncpa [#allocation6], 0
    %20 = vsyncpa [#allocation9], 0
    %21 = vsyncpa [#allocation4], 0
    // Predicated region
    $region2: #{tpu_custom_call.1} parent=1 // pred_check
      _
    $region3: #{tpu_custom_call.1} parent=1 // pred_check_branch
      %23 = sbr.rel (0) target = $region5
    $region4: #{tpu_custom_call.1} parent=1 // pred_region
      %25 = vsyncadd [#allocation3], 0
      %s26 = sshll.u32 %s0, 4
      %s27 = int_to_ptr.hbm [resolvable:$true] %s26
      %s28 = sshll.u32 [#allocation2], 4
      %s29 = int_to_ptr.vmem [resolvable:$true] %s28
      %34 = dma.hbm_to_vmem [thread:$0]  %s27, 256, %s29, [#allocation3], 128, 128, 8
    $region5: #{tpu_custom_call.1} parent=1 // pred_fallthru
      _
    // Predicated region
    $region6: #{tpu_custom_call.1} parent=1 // pred_check
      _
    $region7: #{tpu_custom_call.1} parent=1 // pred_check_branch
      %36 = sbr.rel (0) target = $region9
    $region8: #{tpu_custom_call.1} parent=1 // pred_region
      _
    $region9: #{tpu_custom_call.1} parent=1 // pred_fallthru
      _
    // Predicated region
    $region10: #{tpu_custom_call.1} parent=1 // pred_check
      _
    $region11: #{tpu_custom_call.1} parent=1 // pred_check_branch
      %38 = sbr.rel (0) target = $region13
    $region12: #{tpu_custom_call.1} parent=1 // pred_region
      %40 = vsyncadd [#allocation6], 0
      %s41 = sshll.u32 %s2, 4
      %s42 = int_to_ptr.hbm [resolvable:$true] %s41
      %s43 = sshll.u32 [#allocation5], 4
      %s44 = int_to_ptr.vmem [resolvable:$true] %s43
      %49 = dma.hbm_to_vmem [thread:$0]  %s42, 512, %s44, [#allocation6], 64, 64, 4
    $region13: #{tpu_custom_call.1} parent=1 // pred_fallthru
      _
    // Predicated region
    $region14: #{tpu_custom_call.1} parent=1 // pred_check
      _
    $region15: #{tpu_custom_call.1} parent=1 // pred_check_branch
      %51 = sbr.rel (0) target = $region17
    $region16: #{tpu_custom_call.1} parent=1 // pred_region
      _
    $region17: #{tpu_custom_call.1} parent=1 // pred_fallthru
      _
    // Predicated region
    $region18: #{tpu_custom_call.1} parent=1 // pred_check
      _
    $region19: #{tpu_custom_call.1} parent=1 // pred_check_branch
      %53 = sbr.rel (0) target = $region21
    $region20: #{tpu_custom_call.1} parent=1 // pred_region
      _
    $region21: #{tpu_custom_call.1} parent=1 // pred_fallthru
      _
    // Predicated region
    $region22: #{tpu_custom_call.1} parent=1 // pred_check
      _
    $region23: #{tpu_custom_call.1} parent=1 // pred_check_branch
      %55 = sbr.rel (0) target = $region25
    $region24: #{tpu_custom_call.1} parent=1 // pred_region
      _
    $region25: #{tpu_custom_call.1} parent=1 // pred_fallthru
      _
    // Predicated region
    $region26: #{tpu_custom_call.1} parent=1 // pred_check
      _
    $region27: #{tpu_custom_call.1} parent=1 // pred_check_branch
      %57 = sbr.rel (0) target = $region29
    $region28: #{tpu_custom_call.1} parent=1 // pred_region
      %59 = vsyncadd [#allocation6], 0
      %s60 = sshll.u32 %s6, 4
      %s61 = int_to_ptr.hbm [resolvable:$true] %s60
      %s62 = sshll.u32 [#allocation7], 4
      %s63 = int_to_ptr.vmem [resolvable:$true] %s62
      %68 = dma.hbm_to_vmem [thread:$0]  %s61, 512, %s63, [#allocation6], 128, 128, 8
    $region29: #{tpu_custom_call.1} parent=1 // pred_fallthru
      _
    // Predicated region
    $region30: #{tpu_custom_call.1} parent=1 // pred_check
      _
    $region31: #{tpu_custom_call.1} parent=1 // pred_check_branch
      %70 = sbr.rel (0) target = $region33
    $region32: #{tpu_custom_call.1} parent=1 // pred_region
      _
    $region33: #{tpu_custom_call.1} parent=1 // pred_fallthru
      _
    // Predicated region
    $region34: #{tpu_custom_call.1} parent=1 // pred_check
      _
    $region35: #{tpu_custom_call.1} parent=1 // pred_check_branch
      %72 = sbr.rel (0) target = $region37
    $region36: #{tpu_custom_call.1} parent=1 // pred_region
      %74 = vsyncadd [#allocation9], 0
      %s75 = sshll.u32 %s8, 4
      %s76 = int_to_ptr.hbm [resolvable:$true] %s75
      %s77 = sshll.u32 [#allocation8], 4
      %s78 = int_to_ptr.vmem [resolvable:$true] %s77
      %83 = dma.hbm_to_vmem [thread:$0]  %s76, 512, %s78, [#allocation9], 128, 128, 8
    $region37: #{tpu_custom_call.1} parent=1 // pred_fallthru
      _
    // Predicated region
    $region38: #{tpu_custom_call.1} parent=1 // pred_check
      _
    $region39: #{tpu_custom_call.1} parent=1 // pred_check_branch
      %85 = sbr.rel (0) target = $region41
    $region40: #{tpu_custom_call.1} parent=1 // pred_region
      _
    $region41: #{tpu_custom_call.1} parent=1 // pred_fallthru
      _
    // Predicated region
    $region42: #{tpu_custom_call.1} parent=1 // pred_check
      _
    $region43: #{tpu_custom_call.1} parent=1 // pred_check_branch
      %87 = sbr.rel (0) target = $region45
    $region44: #{tpu_custom_call.1} parent=1 // pred_region
      _
    $region45: #{tpu_custom_call.1} parent=1 // pred_fallthru
      _
    // Predicated region
    $region46: #{tpu_custom_call.1} parent=1 // pred_check
      _
    $region47: #{tpu_custom_call.1} parent=1 // pred_check_branch
      %89 = sbr.rel (0) target = $region49
    $region48: #{tpu_custom_call.1} parent=1 // pred_region
      _
    $region49: #{tpu_custom_call.1} parent=1 // pred_fallthru
      _
    // Predicated region
    $region50: #{tpu_custom_call.1} parent=1 // pred_check
      _
    $region51: #{tpu_custom_call.1} parent=1 // pred_check_branch
      %91 = sbr.rel (0) target = $region53
    $region52: #{tpu_custom_call.1} parent=1 // pred_region
      _
    $region53: #{tpu_custom_call.1} parent=1 // pred_fallthru
      _
    // Predicated region
    $region54: #{tpu_custom_call.1} parent=1 // pred_check
      _
    $region55: #{tpu_custom_call.1} parent=1 // pred_check_branch
      %93 = sbr.rel (0) target = $region57
    $region56: #{tpu_custom_call.1} parent=1 // pred_region
      %95 = dma.done [#allocation3], 256
    $region57: #{tpu_custom_call.1} parent=1 // pred_fallthru
      _
    // Predicated region
    $region58: #{tpu_custom_call.1} parent=1 // pred_check
      _
    $region59: #{tpu_custom_call.1} parent=1 // pred_check_branch
      %97 = sbr.rel (0) target = $region61
    $region60: #{tpu_custom_call.1} parent=1 // pred_region
      %99 = dma.done [#allocation6], 512
    $region61: #{tpu_custom_call.1} parent=1 // pred_fallthru
      _
    // Predicated region
    $region62: #{tpu_custom_call.1} parent=1 // pred_check
      _
    $region63: #{tpu_custom_call.1} parent=1 // pred_check_branch
      %101 = sbr.rel (0) target = $region65
    $region64: #{tpu_custom_call.1} parent=1 // pred_region
      %103 = dma.done [#allocation6], 512
    $region65: #{tpu_custom_call.1} parent=1 // pred_fallthru
      _
    // Predicated region
    $region66: #{tpu_custom_call.1} parent=1 // pred_check
      _
    $region67: #{tpu_custom_call.1} parent=1 // pred_check_branch
      %105 = sbr.rel (0) target = $region69
    $region68: #{tpu_custom_call.1} parent=1 // pred_region
      %107 = dma.done [#allocation9], 512
    $region69: #{tpu_custom_call.1} parent=1 // pred_fallthru
      _
    %v109 = vld [vmem:[#allocation2] sm:$0xff]
    %v110 = vld [vmem:[#allocation2 + $0x8] sm:$0xff]
    %v111 = vld [vmem:[%s1] sm:$0xf]
    %v112 = vld [vmem:[%s1 + $0x4] sm:$0xf]
    %v113 = vld [vmem:[%s1 + $0x8] sm:$0xf]
    %v114 = vld [vmem:[%s1 + $0xc] sm:$0xf]
    %v115 = vld [vmem:[%s1 + $0x10] sm:$0xf]
    %v116 = vld [vmem:[%s1 + $0x14] sm:$0xf]
    %v117 = vld [vmem:[%s1 + $0x18] sm:$0xf]
    %v118 = vld [vmem:[%s1 + $0x1c] sm:$0xf]
    %v119 = vld [vmem:[#allocation5] sm:$0xf]
    %v120 = vld [vmem:[#allocation5 + $0x4] sm:$0xf]
    %v121 = vld [vmem:[#allocation5 + $0x8] sm:$0xf]
    %v122 = vld [vmem:[#allocation5 + $0xc] sm:$0xf]
    %v123 = vld [vmem:[#allocation5 + $0x10] sm:$0xf]
    %v124 = vld [vmem:[#allocation5 + $0x14] sm:$0xf]
    %v125 = vld [vmem:[#allocation5 + $0x18] sm:$0xf]
    %v126 = vld [vmem:[#allocation5 + $0x1c] sm:$0xf]
    %v127 = vpack.c.bf16 %v109, %v109
    %v128 = vpack.c.bf16 %v110, %v110
    %v129 = vunpack.c.l.bf16 %v127
    %v130 = vunpack.c.l.bf16 %v128
    %v131 = vsub.f32 %v109, %v129
    %v132 = vsub.f32 %v110, %v130
    %v133 = vpack.c.bf16 %v132, %v131
    %v142 = vunpack.c.l.b16 %v111
    %v143 = vunpack.c.l.b16 %v112
    %v144 = vunpack.c.l.b16 %v113
    %v145 = vunpack.c.l.b16 %v114
    %v146 = vunpack.c.l.b16 %v115
    %v147 = vunpack.c.l.b16 %v116
    %v148 = vunpack.c.l.b16 %v117
    %v149 = vunpack.c.l.b16 %v118
    %v150 = vpack.c.b16 %v143, %v142
    %v151 = vpack.c.b16 %v145, %v144
    %v152 = vpack.c.b16 %v147, %v146
    %v153 = vpack.c.b16 %v149, %v148
    %vm158 = vcmask 523264
    %v160 = vsel %vm158, %v133, 0
    %162 = vmatpush.bf16.msra.mxu0 0
    %163 = vmatpush.bf16.msra.mxu0 0
    %164 = vmatpush.bf16.msra.mxu0 0
    %165 = vmatpush.bf16.msra.mxu0 0
    %166 = vmatpush.bf16.msra.mxu0 %v153
    %167 = vmatpush.bf16.msra.mxu0 %v152
    %168 = vmatpush.bf16.msra.mxu0 %v151
    %169 = vmatpush.bf16.msra.mxu0 %v150
    %170 = vmatmul.bf16.gmra.mxu0 %v160
    %v171 = vpop.f32.mrf.mxu0
    %v172 = vadd.f32 0.0, %v171
    %v173 = vpop.f32.mrf.mxu0
    %v174 = vadd.f32 0.0, %v173
    %175 = vdwg.mxu0
    %v178 = vunpack.c.l.b16 %v127
    %v179 = vunpack.c.l.b16 %v128
    %v180 = vpack.c.b16 %v179, %v178
    %v182 = vsel %vm158, %v180, 0
    %184 = vmatpush.bf16.msra.mxu0 0
    %185 = vmatpush.bf16.msra.mxu0 0
    %186 = vmatpush.bf16.msra.mxu0 0
    %187 = vmatpush.bf16.msra.mxu0 0
    %188 = vmatpush.bf16.msra.mxu0 %v153
    %189 = vmatpush.bf16.msra.mxu0 %v152
    %190 = vmatpush.bf16.msra.mxu0 %v151
    %191 = vmatpush.bf16.msra.mxu0 %v150
    %192 = vmatmul.bf16.gmra.mxu0 %v182
    %v193 = vpop.f32.mrf.mxu0
    %v194 = vadd.f32 %v172, %v193
    %v195 = vpop.f32.mrf.mxu0
    %v196 = vadd.f32 %v174, %v195
    %197 = vdwg.mxu0
    %v206 = vunpack.c.l.b16 %v119
    %v207 = vunpack.c.l.b16 %v120
    %v208 = vunpack.c.l.b16 %v121
    %v209 = vunpack.c.l.b16 %v122
    %v210 = vunpack.c.l.b16 %v123
    %v211 = vunpack.c.l.b16 %v124
    %v212 = vunpack.c.l.b16 %v125
    %v213 = vunpack.c.l.b16 %v126
    %v214 = vpack.c.b16 %v207, %v206
    %v215 = vpack.c.b16 %v209, %v208
    %v216 = vpack.c.b16 %v211, %v210
    %v217 = vpack.c.b16 %v213, %v212
    %222 = vmatpush.bf16.msra.mxu0 0
    %223 = vmatpush.bf16.msra.mxu0 0
    %224 = vmatpush.bf16.msra.mxu0 0
    %225 = vmatpush.bf16.msra.mxu0 0
    %226 = vmatpush.bf16.msra.mxu0 %v217
    %227 = vmatpush.bf16.msra.mxu0 %v216
    %228 = vmatpush.bf16.msra.mxu0 %v215
    %229 = vmatpush.bf16.msra.mxu0 %v214
    %230 = vmatmul.bf16.gmra.mxu0 %v182
    %v231 = vpop.f32.mrf.mxu0
    %v232 = vadd.f32 0.0, %v231
    %v233 = vpop.f32.mrf.mxu0
    %v234 = vadd.f32 0.0, %v233
    %235 = vdwg.mxu0
    %v236 = vadd.f32 %v194, %v232
    %v237 = vadd.f32 %v196, %v234
    %v238 = vld [vmem:[%s3] sm:$0x1]
    %v240 = vperm.slane %v238, 0
    %v242 = vadd.f32 %v236, %v240
    %v243 = vadd.f32 %v237, %v240
    %v244 = vmul.f32 %v242, 0.5
    %v245 = vmul.f32 %v243, 0.5
    %v246 = vmul.f32 %v242, 0.70710677
    %v247 = vmul.f32 %v243, 0.70710677
    %v248 = vmul.f32 %v246, %v246
    %v249 = vmin.f32 16.0, %v248
    %v250 = vmul.f32 %v249, 2.1237322e-06
    %v251 = vadd.f32 %v250, 0.00028619796
    %v252 = vmul.f32 %v249, %v251
    %v253 = vadd.f32 %v252, 0.0036580483
    %v254 = vmul.f32 %v249, %v253
    %v255 = vadd.f32 %v254, 0.05243302
    %v256 = vmul.f32 %v249, %v255
    %v257 = vadd.f32 %v256, 0.18741608
    %v258 = vmul.f32 %v249, %v257
    %v259 = vadd.f32 %v258, 1.1283791
    %v260 = vmul.f32 %v246, %v259
    %v261 = vmul.f32 %v249, 3.8918573e-05
    %v262 = vadd.f32 %v261, 0.001143296
    %v263 = vmul.f32 %v249, %v262
    %v264 = vadd.f32 %v263, 0.014752088
    %v265 = vmul.f32 %v249, %v264
    %v266 = vadd.f32 %v265, 0.112945676
    %v267 = vmul.f32 %v249, %v266
    %v268 = vadd.f32 %v267, 0.4994258
    %v269 = vmul.f32 %v249, %v268
    %v270 = vadd.f32 %v269, 1.0
    %v271 = vrcp.pop %v270
    %v272 = vmul.f32 %v270, %v271
    %v273 = vsub.f32 1.0, %v272
    %v274 = vmul.f32 %v271, %v273
    %v275 = vadd.f32 %v271, %v274
    %vm276 = vweird.f32 %v270
    %vm277 = vweird.f32 %v271
    %vm278 = vmor %vm276, %vm277
    %v279 = vsel %vm278, %v271, %v275
    %v280 = vand.u32 2147483647, %v270
    %vm281 = vcmp.eq.f32.partialorder %v280, 8.507059e+37
    %v282 = vand.u32 %v270, 2147483648
    %v283 = vor.u32 1.1754944e-38, %v282
    %v284 = vsel %vm281, %v283, %v279
    %v285 = vmul.f32 %v260, %v284
    %v286 = vmin.f32 %v285, 1.0
    %v287 = vmax.f32 %v286, -1.0
    %v288 = vmul.f32 %v247, %v247
    %v289 = vmin.f32 16.0, %v288
    %v290 = vmul.f32 %v289, 2.1237322e-06
    %v291 = vadd.f32 %v290, 0.00028619796
    %v292 = vmul.f32 %v289, %v291
    %v293 = vadd.f32 %v292, 0.0036580483
    %v294 = vmul.f32 %v289, %v293
    %v295 = vadd.f32 %v294, 0.05243302
    %v296 = vmul.f32 %v289, %v295
    %v297 = vadd.f32 %v296, 0.18741608
    %v298 = vmul.f32 %v289, %v297
    %v299 = vadd.f32 %v298, 1.1283791
    %v300 = vmul.f32 %v247, %v299
    %v301 = vmul.f32 %v289, 3.8918573e-05
    %v302 = vadd.f32 %v301, 0.001143296
    %v303 = vmul.f32 %v289, %v302
    %v304 = vadd.f32 %v303, 0.014752088
    %v305 = vmul.f32 %v289, %v304
    %v306 = vadd.f32 %v305, 0.112945676
    %v307 = vmul.f32 %v289, %v306
    %v308 = vadd.f32 %v307, 0.4994258
    %v309 = vmul.f32 %v289, %v308
    %v310 = vadd.f32 %v309, 1.0
    %v311 = vrcp.pop %v310
    %v312 = vmul.f32 %v310, %v311
    %v313 = vsub.f32 1.0, %v312
    %v314 = vmul.f32 %v311, %v313
    %v315 = vadd.f32 %v311, %v314
    %vm316 = vweird.f32 %v310
    %vm317 = vweird.f32 %v311
    %vm318 = vmor %vm316, %vm317
    %v319 = vsel %vm318, %v311, %v315
    %v320 = vand.u32 2147483647, %v310
    %vm321 = vcmp.eq.f32.partialorder %v320, 8.507059e+37
    %v322 = vand.u32 %v310, 2147483648
    %v323 = vor.u32 1.1754944e-38, %v322
    %v324 = vsel %vm321, %v323, %v319
    %v325 = vmul.f32 %v300, %v324
    %v326 = vmin.f32 %v325, 1.0
    %v327 = vmax.f32 %v326, -1.0
    %v328 = vadd.f32 %v287, 1.0
    %v329 = vadd.f32 %v327, 1.0
    %v330 = vmul.f32 %v244, %v328
    %v331 = vmul.f32 %v245, %v329
    %v332 = vld [vmem:[%s4] sm:$0xff]
    %v333 = vld [vmem:[%s4 + $0x8] sm:$0xff]
    %v334 = vld [vmem:[%s4 + $0x10] sm:$0xff]
    %v335 = vld [vmem:[%s4 + $0x18] sm:$0xff]
    %v336 = vld [vmem:[%s4 + $0x20] sm:$0xff]
    %v337 = vld [vmem:[%s4 + $0x28] sm:$0xff]
    %v338 = vld [vmem:[%s4 + $0x30] sm:$0xff]
    %v339 = vld [vmem:[%s4 + $0x38] sm:$0xff]
    %v340 = vld [vmem:[%s4 + $0x40] sm:$0xff]
    %v341 = vld [vmem:[%s4 + $0x48] sm:$0xff]
    %v342 = vld [vmem:[%s4 + $0x50] sm:$0xff]
    %v343 = vld [vmem:[%s4 + $0x58] sm:$0xff]
    %v344 = vld [vmem:[%s4 + $0x60] sm:$0xff]
    %v345 = vld [vmem:[%s4 + $0x68] sm:$0xff]
    %v346 = vld [vmem:[%s4 + $0x70] sm:$0xff]
    %v347 = vld [vmem:[%s4 + $0x78] sm:$0xff]
    %v348 = vld [vmem:[%s5] sm:$0x1]
    %v350 = vperm.slane %v348, 0
    %352 = vmatpush.msra.mxu0 %v347
    %353 = vmatpush.msra.mxu0 %v346
    %354 = vmatpush.msra.mxu0 %v345
    %355 = vmatpush.msra.mxu0 %v344
    %356 = vmatpush.msra.mxu0 %v343
    %357 = vmatpush.msra.mxu0 %v342
    %358 = vmatpush.msra.mxu0 %v341
    %359 = vmatpush.msra.mxu0 %v340
    %360 = vmatpush.msra.mxu0 %v339
    %361 = vmatpush.msra.mxu0 %v338
    %362 = vmatpush.msra.mxu0 %v337
    %363 = vmatpush.msra.mxu0 %v336
    %364 = vmatpush.msra.mxu0 %v335
    %365 = vmatpush.msra.mxu0 %v334
    %366 = vmatpush.msra.mxu0 %v333
    %367 = vmatpush.msra.mxu0 %v332
    %368 = vmatmul.f32.gmra.mxu0 %v330
    %v369 = vpop.f32.mrf.mxu0
    %v370 = vadd.f32 %v350, %v369
    %371 = vmatmul.f32.gmra.mxu0 %v331
    %v372 = vpop.f32.mrf.mxu0
    %v373 = vadd.f32 %v350, %v372
    %374 = vdwg.mxu0
    %v375 = vmul.f32 %v370, 0.5
    %v376 = vmul.f32 %v373, 0.5
    %v377 = vmul.f32 %v370, 0.70710677
    %v378 = vmul.f32 %v373, 0.70710677
    %v379 = vmul.f32 %v377, %v377
    %v380 = vmin.f32 16.0, %v379
    %v381 = vmul.f32 %v380, 2.1237322e-06
    %v382 = vadd.f32 %v381, 0.00028619796
    %v383 = vmul.f32 %v380, %v382
    %v384 = vadd.f32 %v383, 0.0036580483
    %v385 = vmul.f32 %v380, %v384
    %v386 = vadd.f32 %v385, 0.05243302
    %v387 = vmul.f32 %v380, %v386
    %v388 = vadd.f32 %v387, 0.18741608
    %v389 = vmul.f32 %v380, %v388
    %v390 = vadd.f32 %v389, 1.1283791
    %v391 = vmul.f32 %v377, %v390
    %v392 = vmul.f32 %v380, 3.8918573e-05
    %v393 = vadd.f32 %v392, 0.001143296
    %v394 = vmul.f32 %v380, %v393
    %v395 = vadd.f32 %v394, 0.014752088
    %v396 = vmul.f32 %v380, %v395
    %v397 = vadd.f32 %v396, 0.112945676
    %v398 = vmul.f32 %v380, %v397
    %v399 = vadd.f32 %v398, 0.4994258
    %v400 = vmul.f32 %v380, %v399
    %v401 = vadd.f32 %v400, 1.0
    %v402 = vrcp.pop %v401
    %v403 = vmul.f32 %v401, %v402
    %v404 = vsub.f32 1.0, %v403
    %v405 = vmul.f32 %v402, %v404
    %v406 = vadd.f32 %v402, %v405
    %vm407 = vweird.f32 %v401
    %vm408 = vweird.f32 %v402
    %vm409 = vmor %vm407, %vm408
    %v410 = vsel %vm409, %v402, %v406
    %v411 = vand.u32 2147483647, %v401
    %vm412 = vcmp.eq.f32.partialorder %v411, 8.507059e+37
    %v413 = vand.u32 %v401, 2147483648
    %v414 = vor.u32 1.1754944e-38, %v413
    %v415 = vsel %vm412, %v414, %v410
    %v416 = vmul.f32 %v391, %v415
    %v417 = vmin.f32 %v416, 1.0
    %v418 = vmax.f32 %v417, -1.0
    %v419 = vmul.f32 %v378, %v378
    %v420 = vmin.f32 16.0, %v419
    %v421 = vmul.f32 %v420, 2.1237322e-06
    %v422 = vadd.f32 %v421, 0.00028619796
    %v423 = vmul.f32 %v420, %v422
    %v424 = vadd.f32 %v423, 0.0036580483
    %v425 = vmul.f32 %v420, %v424
    %v426 = vadd.f32 %v425, 0.05243302
    %v427 = vmul.f32 %v420, %v426
    %v428 = vadd.f32 %v427, 0.18741608
    %v429 = vmul.f32 %v420, %v428
    %v430 = vadd.f32 %v429, 1.1283791
    %v431 = vmul.f32 %v378, %v430
    %v432 = vmul.f32 %v420, 3.8918573e-05
    %v433 = vadd.f32 %v432, 0.001143296
    %v434 = vmul.f32 %v420, %v433
    %v435 = vadd.f32 %v434, 0.014752088
    %v436 = vmul.f32 %v420, %v435
    %v437 = vadd.f32 %v436, 0.112945676
    %v438 = vmul.f32 %v420, %v437
    %v439 = vadd.f32 %v438, 0.4994258
    %v440 = vmul.f32 %v420, %v439
    %v441 = vadd.f32 %v440, 1.0
    %v442 = vrcp.pop %v441
    %v443 = vmul.f32 %v441, %v442
    %v444 = vsub.f32 1.0, %v443
    %v445 = vmul.f32 %v442, %v444
    %v446 = vadd.f32 %v442, %v445
    %vm447 = vweird.f32 %v441
    %vm448 = vweird.f32 %v442
    %vm449 = vmor %vm447, %vm448
    %v450 = vsel %vm449, %v442, %v446
    %v451 = vand.u32 2147483647, %v441
    %vm452 = vcmp.eq.f32.partialorder %v451, 8.507059e+37
    %v453 = vand.u32 %v441, 2147483648
    %v454 = vor.u32 1.1754944e-38, %v453
    %v455 = vsel %vm452, %v454, %v450
    %v456 = vmul.f32 %v431, %v455
    %v457 = vmin.f32 %v456, 1.0
    %v458 = vmax.f32 %v457, -1.0
    %v459 = vadd.f32 %v418, 1.0
    %v460 = vadd.f32 %v458, 1.0
    %v461 = vmul.f32 %v375, %v459
    %v462 = vmul.f32 %v376, %v460
    %v463 = vld [vmem:[#allocation7] sm:$0xff]
    %v464 = vld [vmem:[#allocation7 + $0x8] sm:$0xff]
    %v465 = vld [vmem:[#allocation7 + $0x10] sm:$0xff]
    %v466 = vld [vmem:[#allocation7 + $0x18] sm:$0xff]
    %v467 = vld [vmem:[%s7] sm:$0x1]
    %v469 = vperm.slane %v467, 0
    %vm471 = vcmask 261120
    %v473 = vsel %vm471, %v461, 0
    %v476 = vsel %vm471, %v462, 0
    %478 = vmatpush.msra.mxu0 0.0
    %479 = vmatpush.msra.mxu0 0.0
    %480 = vmatpush.msra.mxu0 0.0
    %481 = vmatpush.msra.mxu0 0.0
    %482 = vmatpush.msra.mxu0 0.0
    %483 = vmatpush.msra.mxu0 0.0
    %484 = vmatpush.msra.mxu0 0.0
    %485 = vmatpush.msra.mxu0 0.0
    %486 = vmatpush.msra.mxu0 0.0
    %487 = vmatpush.msra.mxu0 0.0
    %488 = vmatpush.msra.mxu0 0.0
    %489 = vmatpush.msra.mxu0 0.0
    %490 = vmatpush.msra.mxu0 %v466
    %491 = vmatpush.msra.mxu0 %v465
    %492 = vmatpush.msra.mxu0 %v464
    %493 = vmatpush.msra.mxu0 %v463
    %494 = vmatmul.f32.gmra.mxu0 %v473
    %v495 = vpop.f32.mrf.mxu0
    %v496 = vadd.f32 %v469, %v495
    %497 = vmatmul.f32.gmra.mxu0 %v476
    %v498 = vpop.f32.mrf.mxu0
    %v499 = vadd.f32 %v469, %v498
    %500 = vdwg.mxu0
    %v501 = vmul.f32 %v496, 0.5
    %v502 = vmul.f32 %v499, 0.5
    %v503 = vmul.f32 %v496, 0.70710677
    %v504 = vmul.f32 %v499, 0.70710677
    %v505 = vmul.f32 %v503, %v503
    %v506 = vmin.f32 16.0, %v505
    %v507 = vmul.f32 %v506, 2.1237322e-06
    %v508 = vadd.f32 %v507, 0.00028619796
    %v509 = vmul.f32 %v506, %v508
    %v510 = vadd.f32 %v509, 0.0036580483
    %v511 = vmul.f32 %v506, %v510
    %v512 = vadd.f32 %v511, 0.05243302
    %v513 = vmul.f32 %v506, %v512
    %v514 = vadd.f32 %v513, 0.18741608
    %v515 = vmul.f32 %v506, %v514
    %v516 = vadd.f32 %v515, 1.1283791
    %v517 = vmul.f32 %v503, %v516
    %v518 = vmul.f32 %v506, 3.8918573e-05
    %v519 = vadd.f32 %v518, 0.001143296
    %v520 = vmul.f32 %v506, %v519
    %v521 = vadd.f32 %v520, 0.014752088
    %v522 = vmul.f32 %v506, %v521
    %v523 = vadd.f32 %v522, 0.112945676
    %v524 = vmul.f32 %v506, %v523
    %v525 = vadd.f32 %v524, 0.4994258
    %v526 = vmul.f32 %v506, %v525
    %v527 = vadd.f32 %v526, 1.0
    %v528 = vrcp.pop %v527
    %v529 = vmul.f32 %v527, %v528
    %v530 = vsub.f32 1.0, %v529
    %v531 = vmul.f32 %v528, %v530
    %v532 = vadd.f32 %v528, %v531
    %vm533 = vweird.f32 %v527
    %vm534 = vweird.f32 %v528
    %vm535 = vmor %vm533, %vm534
    %v536 = vsel %vm535, %v528, %v532
    %v537 = vand.u32 2147483647, %v527
    %vm538 = vcmp.eq.f32.partialorder %v537, 8.507059e+37
    %v539 = vand.u32 %v527, 2147483648
    %v540 = vor.u32 1.1754944e-38, %v539
    %v541 = vsel %vm538, %v540, %v536
    %v542 = vmul.f32 %v517, %v541
    %v543 = vmin.f32 %v542, 1.0
    %v544 = vmax.f32 %v543, -1.0
    %v545 = vmul.f32 %v504, %v504
    %v546 = vmin.f32 16.0, %v545
    %v547 = vmul.f32 %v546, 2.1237322e-06
    %v548 = vadd.f32 %v547, 0.00028619796
    %v549 = vmul.f32 %v546, %v548
    %v550 = vadd.f32 %v549, 0.0036580483
    %v551 = vmul.f32 %v546, %v550
    %v552 = vadd.f32 %v551, 0.05243302
    %v553 = vmul.f32 %v546, %v552
    %v554 = vadd.f32 %v553, 0.18741608
    %v555 = vmul.f32 %v546, %v554
    %v556 = vadd.f32 %v555, 1.1283791
    %v557 = vmul.f32 %v504, %v556
    %v558 = vmul.f32 %v546, 3.8918573e-05
    %v559 = vadd.f32 %v558, 0.001143296
    %v560 = vmul.f32 %v546, %v559
    %v561 = vadd.f32 %v560, 0.014752088
    %v562 = vmul.f32 %v546, %v561
    %v563 = vadd.f32 %v562, 0.112945676
    %v564 = vmul.f32 %v546, %v563
    %v565 = vadd.f32 %v564, 0.4994258
    %v566 = vmul.f32 %v546, %v565
    %v567 = vadd.f32 %v566, 1.0
    %v568 = vrcp.pop %v567
    %v569 = vmul.f32 %v567, %v568
    %v570 = vsub.f32 1.0, %v569
    %v571 = vmul.f32 %v568, %v570
    %v572 = vadd.f32 %v568, %v571
    %vm573 = vweird.f32 %v567
    %vm574 = vweird.f32 %v568
    %vm575 = vmor %vm573, %vm574
    %v576 = vsel %vm575, %v568, %v572
    %v577 = vand.u32 2147483647, %v567
    %vm578 = vcmp.eq.f32.partialorder %v577, 8.507059e+37
    %v579 = vand.u32 %v567, 2147483648
    %v580 = vor.u32 1.1754944e-38, %v579
    %v581 = vsel %vm578, %v580, %v576
    %v582 = vmul.f32 %v557, %v581
    %v583 = vmin.f32 %v582, 1.0
    %v584 = vmax.f32 %v583, -1.0
    %v585 = vadd.f32 %v544, 1.0
    %v586 = vadd.f32 %v584, 1.0
    %v587 = vmul.f32 %v501, %v585
    %v588 = vmul.f32 %v502, %v586
    %v589 = vld [vmem:[#allocation8] sm:$0xff]
    %v590 = vld [vmem:[#allocation8 + $0x8] sm:$0xff]
    %v591 = vld [vmem:[#allocation8 + $0x10] sm:$0xff]
    %v592 = vld [vmem:[#allocation8 + $0x18] sm:$0xff]
    %v593 = vld [vmem:[%s9] sm:$0x1]
    %v595 = vperm.slane %v593, 0
    %v598 = vsel %vm471, %v587, 0
    %v601 = vsel %vm471, %v588, 0
    %603 = vmatpush.msra.mxu0 0.0
    %604 = vmatpush.msra.mxu0 0.0
    %605 = vmatpush.msra.mxu0 0.0
    %606 = vmatpush.msra.mxu0 0.0
    %607 = vmatpush.msra.mxu0 0.0
    %608 = vmatpush.msra.mxu0 0.0
    %609 = vmatpush.msra.mxu0 0.0
    %610 = vmatpush.msra.mxu0 0.0
    %611 = vmatpush.msra.mxu0 0.0
    %612 = vmatpush.msra.mxu0 0.0
    %613 = vmatpush.msra.mxu0 0.0
    %614 = vmatpush.msra.mxu0 0.0
    %615 = vmatpush.msra.mxu0 %v592
    %616 = vmatpush.msra.mxu0 %v591
    %617 = vmatpush.msra.mxu0 %v590
    %618 = vmatpush.msra.mxu0 %v589
    %619 = vmatmul.f32.gmra.mxu0 %v598
    %v620 = vpop.f32.mrf.mxu0
    %v621 = vadd.f32 %v595, %v620
    %622 = vmatmul.f32.gmra.mxu0 %v601
    %v623 = vpop.f32.mrf.mxu0
    %v624 = vadd.f32 %v595, %v623
    %625 = vdwg.mxu0
    %v626 = vmul.f32 %v621, 0.5
    %v627 = vmul.f32 %v624, 0.5
    %v628 = vmul.f32 %v621, 0.70710677
    %v629 = vmul.f32 %v624, 0.70710677
    %v630 = vmul.f32 %v628, %v628
    %v631 = vmin.f32 16.0, %v630
    %v632 = vmul.f32 %v631, 2.1237322e-06
    %v633 = vadd.f32 %v632, 0.00028619796
    %v634 = vmul.f32 %v631, %v633
    %v635 = vadd.f32 %v634, 0.0036580483
    %v636 = vmul.f32 %v631, %v635
    %v637 = vadd.f32 %v636, 0.05243302
    %v638 = vmul.f32 %v631, %v637
    %v639 = vadd.f32 %v638, 0.18741608
    %v640 = vmul.f32 %v631, %v639
    %v641 = vadd.f32 %v640, 1.1283791
    %v642 = vmul.f32 %v628, %v641
    %v643 = vmul.f32 %v631, 3.8918573e-05
    %v644 = vadd.f32 %v643, 0.001143296
    %v645 = vmul.f32 %v631, %v644
    %v646 = vadd.f32 %v645, 0.014752088
    %v647 = vmul.f32 %v631, %v646
    %v648 = vadd.f32 %v647, 0.112945676
    %v649 = vmul.f32 %v631, %v648
    %v650 = vadd.f32 %v649, 0.4994258
    %v651 = vmul.f32 %v631, %v650
    %v652 = vadd.f32 %v651, 1.0
    %v653 = vrcp.pop %v652
    %v654 = vmul.f32 %v652, %v653
    %v655 = vsub.f32 1.0, %v654
    %v656 = vmul.f32 %v653, %v655
    %v657 = vadd.f32 %v653, %v656
    %vm658 = vweird.f32 %v652
    %vm659 = vweird.f32 %v653
    %vm660 = vmor %vm658, %vm659
    %v661 = vsel %vm660, %v653, %v657
    %v662 = vand.u32 2147483647, %v652
    %vm663 = vcmp.eq.f32.partialorder %v662, 8.507059e+37
    %v664 = vand.u32 %v652, 2147483648
    %v665 = vor.u32 1.1754944e-38, %v664
    %v666 = vsel %vm663, %v665, %v661
    %v667 = vmul.f32 %v642, %v666
    %v668 = vmin.f32 %v667, 1.0
    %v669 = vmax.f32 %v668, -1.0
    %v670 = vmul.f32 %v629, %v629
    %v671 = vmin.f32 16.0, %v670
    %v672 = vmul.f32 %v671, 2.1237322e-06
    %v673 = vadd.f32 %v672, 0.00028619796
    %v674 = vmul.f32 %v671, %v673
    %v675 = vadd.f32 %v674, 0.0036580483
    %v676 = vmul.f32 %v671, %v675
    %v677 = vadd.f32 %v676, 0.05243302
    %v678 = vmul.f32 %v671, %v677
    %v679 = vadd.f32 %v678, 0.18741608
    %v680 = vmul.f32 %v671, %v679
    %v681 = vadd.f32 %v680, 1.1283791
    %v682 = vmul.f32 %v629, %v681
    %v683 = vmul.f32 %v671, 3.8918573e-05
    %v684 = vadd.f32 %v683, 0.001143296
    %v685 = vmul.f32 %v671, %v684
    %v686 = vadd.f32 %v685, 0.014752088
    %v687 = vmul.f32 %v671, %v686
    %v688 = vadd.f32 %v687, 0.112945676
    %v689 = vmul.f32 %v671, %v688
    %v690 = vadd.f32 %v689, 0.4994258
    %v691 = vmul.f32 %v671, %v690
    %v692 = vadd.f32 %v691, 1.0
    %v693 = vrcp.pop %v692
    %v694 = vmul.f32 %v692, %v693
    %v695 = vsub.f32 1.0, %v694
    %v696 = vmul.f32 %v693, %v695
    %v697 = vadd.f32 %v693, %v696
    %vm698 = vweird.f32 %v692
    %vm699 = vweird.f32 %v693
    %vm700 = vmor %vm698, %vm699
    %v701 = vsel %vm700, %v693, %v697
    %v702 = vand.u32 2147483647, %v692
    %vm703 = vcmp.eq.f32.partialorder %v702, 8.507059e+37
    %v704 = vand.u32 %v692, 2147483648
    %v705 = vor.u32 1.1754944e-38, %v704
    %v706 = vsel %vm703, %v705, %v701
    %v707 = vmul.f32 %v682, %v706
    %v708 = vmin.f32 %v707, 1.0
    %v709 = vmax.f32 %v708, -1.0
    %v710 = vadd.f32 %v669, 1.0
    %v711 = vadd.f32 %v709, 1.0
    %v712 = vmul.f32 %v626, %v710
    %v713 = vmul.f32 %v627, %v711
    %v714 = vld [vmem:[%s10] sm:$0xf]
    %v715 = vld [vmem:[%s10 + $0x4] sm:$0xf]
    %v716 = vld [vmem:[%s10 + $0x8] sm:$0xf]
    %v717 = vld [vmem:[%s10 + $0xc] sm:$0xf]
    %v718 = vld [vmem:[%s10 + $0x10] sm:$0xf]
    %v719 = vld [vmem:[%s10 + $0x14] sm:$0xf]
    %v720 = vld [vmem:[%s10 + $0x18] sm:$0xf]
    %v721 = vld [vmem:[%s10 + $0x1c] sm:$0xf]
    %v722 = vld [vmem:[%s10 + $0x20] sm:$0xf]
    %v723 = vld [vmem:[%s10 + $0x24] sm:$0xf]
    %v724 = vld [vmem:[%s10 + $0x28] sm:$0xf]
    %v725 = vld [vmem:[%s10 + $0x2c] sm:$0xf]
    %v726 = vld [vmem:[%s10 + $0x30] sm:$0xf]
    %v727 = vld [vmem:[%s10 + $0x34] sm:$0xf]
    %v728 = vld [vmem:[%s10 + $0x38] sm:$0xf]
    %v729 = vld [vmem:[%s10 + $0x3c] sm:$0xf]
    %v730 = vld [vmem:[%s11] sm:$0xf]
    %v731 = vld [vmem:[%s11 + $0x4] sm:$0xf]
    %v732 = vld [vmem:[%s11 + $0x8] sm:$0xf]
    %v733 = vld [vmem:[%s11 + $0xc] sm:$0xf]
    %v734 = vld [vmem:[%s11 + $0x10] sm:$0xf]
    %v735 = vld [vmem:[%s11 + $0x14] sm:$0xf]
    %v736 = vld [vmem:[%s11 + $0x18] sm:$0xf]
    %v737 = vld [vmem:[%s11 + $0x1c] sm:$0xf]
    %v738 = vld [vmem:[%s11 + $0x20] sm:$0xf]
    %v739 = vld [vmem:[%s11 + $0x24] sm:$0xf]
    %v740 = vld [vmem:[%s11 + $0x28] sm:$0xf]
    %v741 = vld [vmem:[%s11 + $0x2c] sm:$0xf]
    %v742 = vld [vmem:[%s11 + $0x30] sm:$0xf]
    %v743 = vld [vmem:[%s11 + $0x34] sm:$0xf]
    %v744 = vld [vmem:[%s11 + $0x38] sm:$0xf]
    %v745 = vld [vmem:[%s11 + $0x3c] sm:$0xf]
    %v746 = vpack.c.bf16 %v712, %v712
    %v747 = vpack.c.bf16 %v713, %v713
    %v748 = vunpack.c.l.bf16 %v746
    %v749 = vunpack.c.l.bf16 %v747
    %v750 = vsub.f32 %v712, %v748
    %v751 = vsub.f32 %v713, %v749
    %v752 = vpack.c.bf16 %v751, %v750
    %v769 = vunpack.c.l.b16 %v714
    %v770 = vunpack.c.l.b16 %v715
    %v771 = vunpack.c.l.b16 %v716
    %v772 = vunpack.c.l.b16 %v717
    %v773 = vunpack.c.l.b16 %v718
    %v774 = vunpack.c.l.b16 %v719
    %v775 = vunpack.c.l.b16 %v720
    %v776 = vunpack.c.l.b16 %v721
    %v777 = vunpack.c.l.b16 %v722
    %v778 = vunpack.c.l.b16 %v723
    %v779 = vunpack.c.l.b16 %v724
    %v780 = vunpack.c.l.b16 %v725
    %v781 = vunpack.c.l.b16 %v726
    %v782 = vunpack.c.l.b16 %v727
    %v783 = vunpack.c.l.b16 %v728
    %v784 = vunpack.c.l.b16 %v729
    %v785 = vpack.c.b16 %v770, %v769
    %v786 = vpack.c.b16 %v772, %v771
    %v787 = vpack.c.b16 %v774, %v773
    %v788 = vpack.c.b16 %v776, %v775
    %v789 = vpack.c.b16 %v778, %v777
    %v790 = vpack.c.b16 %v780, %v779
    %v791 = vpack.c.b16 %v782, %v781
    %v792 = vpack.c.b16 %v784, %v783
    %801 = vmatpush.bf16.msra.mxu0 %v792
    %802 = vmatpush.bf16.msra.mxu0 %v791
    %803 = vmatpush.bf16.msra.mxu0 %v790
    %804 = vmatpush.bf16.msra.mxu0 %v789
    %805 = vmatpush.bf16.msra.mxu0 %v788
    %806 = vmatpush.bf16.msra.mxu0 %v787
    %807 = vmatpush.bf16.msra.mxu0 %v786
    %808 = vmatpush.bf16.msra.mxu0 %v785
    %809 = vmatmul.bf16.gmra.mxu0 %v752
    %v810 = vpop.f32.mrf.mxu0
    %v811 = vadd.f32 0.0, %v810
    %v812 = vpop.f32.mrf.mxu0
    %v813 = vadd.f32 0.0, %v812
    %814 = vdwg.mxu0
    %v817 = vunpack.c.l.b16 %v746
    %v818 = vunpack.c.l.b16 %v747
    %v819 = vpack.c.b16 %v818, %v817
    %821 = vmatpush.bf16.msra.mxu0 %v792
    %822 = vmatpush.bf16.msra.mxu0 %v791
    %823 = vmatpush.bf16.msra.mxu0 %v790
    %824 = vmatpush.bf16.msra.mxu0 %v789
    %825 = vmatpush.bf16.msra.mxu0 %v788
    %826 = vmatpush.bf16.msra.mxu0 %v787
    %827 = vmatpush.bf16.msra.mxu0 %v786
    %828 = vmatpush.bf16.msra.mxu0 %v785
    %829 = vmatmul.bf16.gmra.mxu0 %v819
    %v830 = vpop.f32.mrf.mxu0
    %v831 = vadd.f32 %v811, %v830
    %v832 = vpop.f32.mrf.mxu0
    %v833 = vadd.f32 %v813, %v832
    %834 = vdwg.mxu0
    %v851 = vunpack.c.l.b16 %v730
    %v852 = vunpack.c.l.b16 %v731
    %v853 = vunpack.c.l.b16 %v732
    %v854 = vunpack.c.l.b16 %v733
    %v855 = vunpack.c.l.b16 %v734
    %v856 = vunpack.c.l.b16 %v735
    %v857 = vunpack.c.l.b16 %v736
    %v858 = vunpack.c.l.b16 %v737
    %v859 = vunpack.c.l.b16 %v738
    %v860 = vunpack.c.l.b16 %v739
    %v861 = vunpack.c.l.b16 %v740
    %v862 = vunpack.c.l.b16 %v741
    %v863 = vunpack.c.l.b16 %v742
    %v864 = vunpack.c.l.b16 %v743
    %v865 = vunpack.c.l.b16 %v744
    %v866 = vunpack.c.l.b16 %v745
    %v867 = vpack.c.b16 %v852, %v851
    %v868 = vpack.c.b16 %v854, %v853
    %v869 = vpack.c.b16 %v856, %v855
    %v870 = vpack.c.b16 %v858, %v857
    %v871 = vpack.c.b16 %v860, %v859
    %v872 = vpack.c.b16 %v862, %v861
    %v873 = vpack.c.b16 %v864, %v863
    %v874 = vpack.c.b16 %v866, %v865
    %883 = vmatpush.bf16.msra.mxu0 %v874
    %884 = vmatpush.bf16.msra.mxu0 %v873
    %885 = vmatpush.bf16.msra.mxu0 %v872
    %886 = vmatpush.bf16.msra.mxu0 %v871
    %887 = vmatpush.bf16.msra.mxu0 %v870
    %888 = vmatpush.bf16.msra.mxu0 %v869
    %889 = vmatpush.bf16.msra.mxu0 %v868
    %890 = vmatpush.bf16.msra.mxu0 %v867
    %891 = vmatmul.bf16.gmra.mxu0 %v819
    %v892 = vpop.f32.mrf.mxu0
    %v893 = vadd.f32 0.0, %v892
    %v894 = vpop.f32.mrf.mxu0
    %v895 = vadd.f32 0.0, %v894
    %896 = vdwg.mxu0
    %v897 = vadd.f32 %v831, %v893
    %v898 = vadd.f32 %v833, %v895
    %v899 = vld [vmem:[%s12] sm:$0x1]
    %v901 = vperm.slane %v899, 0
    %v903 = vadd.f32 %v897, %v901
    %v904 = vadd.f32 %v898, %v901
    %905 = vst [vmem:[#allocation10] sm:$0xff] %v903
    %906 = vst [vmem:[#allocation10 + $0x8] sm:$0xff] %v904
    // Predicated region
    $region70: #{tpu_custom_call.1} parent=1 // pred_check
      _
    $region71: #{tpu_custom_call.1} parent=1 // pred_check_branch
      %908 = sbr.rel (0) target = $region73
    $region72: #{tpu_custom_call.1} parent=1 // pred_region
      %910 = vsyncadd [#allocation4], 0
      %s911 = sshll.u32 [#allocation10], 4
      %s912 = int_to_ptr.vmem [resolvable:$true] %s911
      %s913 = sshll.u32 %s13, 4
      %s914 = int_to_ptr.hbm [resolvable:$true] %s913
      %919 = dma.vmem_to_hbm [thread:$0]  %s912, 256, %s914, [#allocation4], 128, 128, 8
    $region73: #{tpu_custom_call.1} parent=1 // pred_fallthru
      _
    // Predicated region
    $region74: #{tpu_custom_call.1} parent=1 // pred_check
      _
    $region75: #{tpu_custom_call.1} parent=1 // pred_check_branch
      %921 = sbr.rel (0) target = $region77
    $region76: #{tpu_custom_call.1} parent=1 // pred_region
      %923 = dma.done [#allocation4], 256
    $region77: #{tpu_custom_call.1} parent=1 // pred_fallthru
      _
    %924 = vsyncpa [#allocation3], 1
    %925 = vsyncpa [#allocation6], 1
    %926 = vsyncpa [#allocation9], 1
    %927 = vsyncpa [#allocation4], 1

</llo_original>
